<compile_context>
chip_gen: v6e
topology: v6e:2x2x1
jax: 0.10.0
libtpu: 0.0.40
codegen_flags: <defaults>
</compile_context>

<pallas_src>
import jax
import jax.numpy as jnp
from jax.experimental import pallas as pl
from jax.experimental.pallas import tpu as pltpu

PAD = 128  # lane-dense padded feature width
NUM_LAYERS = 4
FEATURE_DIMS = [(12, 100), (100, 100), (100, 50), (50, 13)]


def mlp_kernel(x_ref, w_ref, b_ref, o_ref):
    """Fused 4-layer MLP on one (TB, 128) batch tile.

    x_ref : (TB, 128)        feature-padded activations
    w_ref : (4, 128, 128)    stacked zero-padded weights, layout (in, out)
    b_ref : (4, 128)         stacked zero-padded biases
    o_ref : (TB, 128)        output tile (columns >= 13 are exactly zero)
    """
    h = x_ref[...]
    acc = None
    for layer in range(NUM_LAYERS):           # unrolled at trace time
        acc = jnp.dot(h, w_ref[layer], preferred_element_type=jnp.float32)
        acc = jnp.maximum(acc + b_ref[layer], 0.0)   # bias + ReLU in f32
        # keep matmul operands in the (possibly bf16) compute dtype; no-op for f32
        h = acc.astype(w_ref.dtype)
    o_ref[...] = acc.astype(o_ref.dtype)


def _round_up(n, m):
    return (n + m - 1) // m * m


def net_forward(x, params, *, block_b=128, compute_dtype=jnp.float32):
    """x: (B, 12); params: list of 4 (W (in,out), b (out,)) pairs. Returns (B, 13)."""
    B, f_in = x.shape
    out_features = params[-1][0].shape[1]

    # --- zero-pad weights / biases to 128x128 tiles and stack into single buffers ---
    w_stack = jnp.zeros((NUM_LAYERS, PAD, PAD), jnp.float32)
    b_stack = jnp.zeros((NUM_LAYERS, PAD), jnp.float32)
    for i, (w, b) in enumerate(params):
        w_stack = w_stack.at[i, : w.shape[0], : w.shape[1]].set(w.astype(jnp.float32))
        b_stack = b_stack.at[i, : w.shape[1]].set(b.reshape(-1).astype(jnp.float32))

    # --- batch tiling: TB multiple of 8, batch zero-padded to a multiple of TB ---
    tb = max(8, min(_round_up(block_b, 8), _round_up(B, 8)))
    b_pad = _round_up(B, tb)
    x_pad = jnp.zeros((b_pad, PAD), jnp.float32).at[:B, :f_in].set(x.astype(jnp.float32))

    # matmul operands in compute_dtype (bf16 on v6e/v7x); accumulation stays f32
    x_pad = x_pad.astype(compute_dtype)
    w_stack = w_stack.astype(compute_dtype)

    grid = (b_pad // tb,)
    itemsize = jnp.dtype(compute_dtype).itemsize
    flops = 2 * b_pad * NUM_LAYERS * PAD * PAD
    bytes_accessed = (
        b_pad * PAD * itemsize                      # x
        + NUM_LAYERS * PAD * PAD * itemsize         # weights
        + NUM_LAYERS * PAD * 4                      # biases (f32)
        + b_pad * PAD * 4                           # output (f32)
    )

    out_padded = pl.pallas_call(
        mlp_kernel,
        out_shape=jax.ShapeDtypeStruct((b_pad, PAD), jnp.float32),
        grid=grid,
        in_specs=[
            pl.BlockSpec((tb, PAD), lambda i: (i, 0)),                  # x batch tile
            pl.BlockSpec((NUM_LAYERS, PAD, PAD), lambda i: (0, 0, 0)),  # weights, VMEM-resident
            pl.BlockSpec((NUM_LAYERS, PAD), lambda i: (0, 0)),          # biases, VMEM-resident
        ],
        out_specs=pl.BlockSpec((tb, PAD), lambda i: (i, 0)),
        compiler_params=pltpu.CompilerParams(
            dimension_semantics=("parallel",),      # shard batch tiles across TCs (v7x)
        ),
        cost_estimate=pl.CostEstimate(
            flops=flops, transcendentals=0, bytes_accessed=bytes_accessed
        ),
    )(x_pad, w_stack, b_stack)

    # slice padding away outside the kernel
    return out_padded[:B, :out_features]


def init_params(key):
    """Deterministic init mimicking PyTorch Linear default (uniform +/- 1/sqrt(fan_in))."""
    params = []
    for (fan_in, fan_out) in FEATURE_DIMS:
        key, kw, kb = jax.random.split(key, 3)
        bound = 1.0 / jnp.sqrt(fan_in)
        w = jax.random.uniform(kw, (fan_in, fan_out), jnp.float32, -bound, bound)
        b = jax.random.uniform(kb, (fan_out,), jnp.float32, -bound, bound)
        params.append((w, b))
    return params


if __name__ == "__main__":
    key = jax.random.PRNGKey(0)
    key, kx = jax.random.split(key)
    batch = 256                      # exercises grid=(2,) with TB=128
    x = jax.random.normal(kx, (batch, 12), jnp.float32)
    params = init_params(key)

    # f32 path (default; used for the tight correctness check)
    out = net_forward(x, params, block_b=128)
    jax.block_until_ready(out)

    # Pure-JAX reference. NOTE: the original PyTorch Net applies ReLU after the
    # final 'predict' Linear as well, so the reference does too.
    ref = x
    for (w, b) in params:
        ref = jnp.maximum(ref @ w + b.reshape(1, -1), 0.0)
    assert out.shape == (batch, 13)
    assert jnp.allclose(out, ref, atol=1e-5, rtol=1e-5), float(jnp.max(jnp.abs(out - ref)))

    # bf16-operand / f32-accumulate path (recommended on v6e/v7x); looser tolerance.
    out_bf16 = net_forward(x, params, block_b=128, compute_dtype=jnp.bfloat16)
    jax.block_until_ready(out_bf16)
    assert out_bf16.shape == (batch, 13)
    assert jnp.allclose(out_bf16, ref, atol=1e-1, rtol=1e-1)

    print("KERNEL_OK")
</pallas_src>

<mosaic_0001>
module attributes {stable_mosaic.version = 11 : i64} {
  func.func @mlp_kernel(%arg0: i32, %arg1: memref<128x128xf32, #tpu.memory_space<vmem>>, %arg2: memref<4x128x128xf32, #tpu.memory_space<vmem>>, %arg3: memref<4x128xf32, #tpu.memory_space<vmem>>, %arg4: memref<128x128xf32, #tpu.memory_space<vmem>>) attributes {dimension_semantics = [#tpu.dimension_semantics<parallel>], iteration_bounds = array<i64: 2>, scalar_prefetch = 0 : i64, scratch_operands = 0 : i64, tpu.core_type = #tpu.core_type<tc>, window_params = [{transform_indices = @transform_0, window_bounds = array<i64: 128, 128>}, {pipeline_mode = #tpu.pipeline_mode<synchronous>, transform_indices = @transform_1, window_bounds = array<i64: 4, 128, 128>}, {pipeline_mode = #tpu.pipeline_mode<synchronous>, transform_indices = @transform_2, window_bounds = array<i64: 4, 128>}, {transform_indices = @transform_3, window_bounds = array<i64: 128, 128>}]} {
    %c0 = arith.constant 0 : index
    %c0_0 = arith.constant 0 : index
    %0 = vector.load %arg1[%c0, %c0_0] : memref<128x128xf32, #tpu.memory_space<vmem>>, vector<128x128xf32>
    %c0_1 = arith.constant 0 : index
    %c0_2 = arith.constant 0 : index
    %c0_3 = arith.constant 0 : index
    %1 = vector.load %arg2[%c0_1, %c0_2, %c0_3] : memref<4x128x128xf32, #tpu.memory_space<vmem>>, vector<1x128x128xf32>
    %2 = vector.shape_cast %1 : vector<1x128x128xf32> to vector<128x128xf32>
    %cst = arith.constant dense<0.000000e+00> : vector<128x128xf32>
    %3 = tpu.matmul %0, %2, %cst {dimension_numbers = #tpu.dot_dimension_numbers<[1], [0], [0], [1], [0, 0, 1, 1], [], []>} : vector<128x128xf32>, vector<128x128xf32>, vector<128x128xf32> -> vector<128x128xf32>
    %c0_4 = arith.constant 0 : index
    %c0_5 = arith.constant 0 : index
    %4 = vector.load %arg3[%c0_4, %c0_5] : memref<4x128xf32, #tpu.memory_space<vmem>>, vector<1x128xf32>
    %5 = vector.shape_cast %4 : vector<1x128xf32> to vector<128xf32>
    %6 = vector.shape_cast %5 : vector<128xf32> to vector<1x128xf32>
    %7 = vector.broadcast %6 : vector<1x128xf32> to vector<128x128xf32>
    %8 = arith.addf %3, %7 : vector<128x128xf32>
    %cst_6 = arith.constant 0.000000e+00 : f32
    %9 = vector.broadcast %cst_6 : f32 to vector<128x128xf32>
    %10 = arith.maximumf %8, %9 : vector<128x128xf32>
    %c1 = arith.constant 1 : index
    %c0_7 = arith.constant 0 : index
    %c0_8 = arith.constant 0 : index
    %11 = vector.load %arg2[%c1, %c0_7, %c0_8] : memref<4x128x128xf32, #tpu.memory_space<vmem>>, vector<1x128x128xf32>
    %12 = vector.shape_cast %11 : vector<1x128x128xf32> to vector<128x128xf32>
    %cst_9 = arith.constant dense<0.000000e+00> : vector<128x128xf32>
    %13 = tpu.matmul %10, %12, %cst_9 {dimension_numbers = #tpu.dot_dimension_numbers<[1], [0], [0], [1], [0, 0, 1, 1], [], []>} : vector<128x128xf32>, vector<128x128xf32>, vector<128x128xf32> -> vector<128x128xf32>
    %c1_10 = arith.constant 1 : index
    %c0_11 = arith.constant 0 : index
    %14 = vector.load %arg3[%c1_10, %c0_11] : memref<4x128xf32, #tpu.memory_space<vmem>>, vector<1x128xf32>
    %15 = vector.shape_cast %14 : vector<1x128xf32> to vector<128xf32>
    %16 = vector.shape_cast %15 : vector<128xf32> to vector<1x128xf32>
    %17 = vector.broadcast %16 : vector<1x128xf32> to vector<128x128xf32>
    %18 = arith.addf %13, %17 : vector<128x128xf32>
    %cst_12 = arith.constant 0.000000e+00 : f32
    %19 = vector.broadcast %cst_12 : f32 to vector<128x128xf32>
    %20 = arith.maximumf %18, %19 : vector<128x128xf32>
    %c2 = arith.constant 2 : index
    %c0_13 = arith.constant 0 : index
    %c0_14 = arith.constant 0 : index
    %21 = vector.load %arg2[%c2, %c0_13, %c0_14] : memref<4x128x128xf32, #tpu.memory_space<vmem>>, vector<1x128x128xf32>
    %22 = vector.shape_cast %21 : vector<1x128x128xf32> to vector<128x128xf32>
    %cst_15 = arith.constant dense<0.000000e+00> : vector<128x128xf32>
    %23 = tpu.matmul %20, %22, %cst_15 {dimension_numbers = #tpu.dot_dimension_numbers<[1], [0], [0], [1], [0, 0, 1, 1], [], []>} : vector<128x128xf32>, vector<128x128xf32>, vector<128x128xf32> -> vector<128x128xf32>
    %c2_16 = arith.constant 2 : index
    %c0_17 = arith.constant 0 : index
    %24 = vector.load %arg3[%c2_16, %c0_17] : memref<4x128xf32, #tpu.memory_space<vmem>>, vector<1x128xf32>
    %25 = vector.shape_cast %24 : vector<1x128xf32> to vector<128xf32>
    %26 = vector.shape_cast %25 : vector<128xf32> to vector<1x128xf32>
    %27 = vector.broadcast %26 : vector<1x128xf32> to vector<128x128xf32>
    %28 = arith.addf %23, %27 : vector<128x128xf32>
    %cst_18 = arith.constant 0.000000e+00 : f32
    %29 = vector.broadcast %cst_18 : f32 to vector<128x128xf32>
    %30 = arith.maximumf %28, %29 : vector<128x128xf32>
    %c3 = arith.constant 3 : index
    %c0_19 = arith.constant 0 : index
    %c0_20 = arith.constant 0 : index
    %31 = vector.load %arg2[%c3, %c0_19, %c0_20] : memref<4x128x128xf32, #tpu.memory_space<vmem>>, vector<1x128x128xf32>
    %32 = vector.shape_cast %31 : vector<1x128x128xf32> to vector<128x128xf32>
    %cst_21 = arith.constant dense<0.000000e+00> : vector<128x128xf32>
    %33 = tpu.matmul %30, %32, %cst_21 {dimension_numbers = #tpu.dot_dimension_numbers<[1], [0], [0], [1], [0, 0, 1, 1], [], []>} : vector<128x128xf32>, vector<128x128xf32>, vector<128x128xf32> -> vector<128x128xf32>
    %c3_22 = arith.constant 3 : index
    %c0_23 = arith.constant 0 : index
    %34 = vector.load %arg3[%c3_22, %c0_23] : memref<4x128xf32, #tpu.memory_space<vmem>>, vector<1x128xf32>
    %35 = vector.shape_cast %34 : vector<1x128xf32> to vector<128xf32>
    %36 = vector.shape_cast %35 : vector<128xf32> to vector<1x128xf32>
    %37 = vector.broadcast %36 : vector<1x128xf32> to vector<128x128xf32>
    %38 = arith.addf %33, %37 : vector<128x128xf32>
    %cst_24 = arith.constant 0.000000e+00 : f32
    %39 = vector.broadcast %cst_24 : f32 to vector<128x128xf32>
    %40 = arith.maximumf %38, %39 : vector<128x128xf32>
    %c0_25 = arith.constant 0 : index
    %c0_26 = arith.constant 0 : index
    %41 = vector.load %arg4[%c0_25, %c0_26] : memref<128x128xf32, #tpu.memory_space<vmem>>, vector<128x128xf32>
    tpu.vector_store %arg4[%c0_25, %c0_26], %40 {strides = array<i32>} : memref<128x128xf32, #tpu.memory_space<vmem>>, vector<128x128xf32>,
    return
  }
  func.func @transform_0(%arg0: i32) -> (i32, i32) {
    %c0_i32 = arith.constant 0 : i32
    %c0_i32_0 = arith.constant 0 : i32
    return %arg0, %c0_i32 : i32, i32
  }
  func.func @transform_1(%arg0: i32) -> (i32, i32, i32) {
    %c0_i32 = arith.constant 0 : i32
    %c0_i32_0 = arith.constant 0 : i32
    %c0_i32_1 = arith.constant 0 : i32
    %c0_i32_2 = arith.constant 0 : i32
    return %c0_i32, %c0_i32_0, %c0_i32_1 : i32, i32, i32
  }
  func.func @transform_2(%arg0: i32) -> (i32, i32) {
    %c0_i32 = arith.constant 0 : i32
    %c0_i32_0 = arith.constant 0 : i32
    %c0_i32_1 = arith.constant 0 : i32
    return %c0_i32, %c0_i32_0 : i32, i32
  }
  func.func @transform_3(%arg0: i32) -> (i32, i32) {
    %c0_i32 = arith.constant 0 : i32
    %c0_i32_0 = arith.constant 0 : i32
    return %arg0, %c0_i32 : i32, i32
  }
}

</mosaic_0001>

<llo_original>
// kernel: tpu_custom_call.1
$region0: #{tpu_custom_call.1}
  #allocation0 [shape = 'u32[]', space=smem, size = 0x4, offset = 0x4, fixed_abs, tag = 'smem constant byte address 0x4 - core index']
  #allocation1 [shape = 'u32[144,128]{1,0:T(1,128)}', space=vmem, size = 0x12000, scoped, tag = 'internal scratch']
  %s0 = inlined_call_operand.hbm [shape: f32[256,128], index: 0, kind: input, shape index: {}]
  %s1 = inlined_call_operand.hbm [shape: f32[4,128,128], index: 1, kind: input, shape index: {}]
  %s2 = inlined_call_operand.hbm [shape: f32[4,128], index: 2, kind: input, shape index: {}]
  %s3 = inlined_call_operand.hbm [shape: f32[256,128], index: 3, kind: output, shape index: {}]
  %s4 = sld [smem:[#allocation0]]
  $region57: #{tpu_custom_call.1} parent=0
    _
  %s6 = ssub.s32 1, %s4
  %s7 = scalar_select 0, %s6, %s4
  $region1: #{tpu_custom_call.1} parent=0
    #allocation2 [shape = 'u8[131072]{0}', space=vmem, size = 0x20000, scoped, tag = 'input window, operand 0']
    #allocation3 [shape = 's32[2]{0}', space=sflag, size = 0x8, scoped, tag = 'scoped memory for tpu_custom_call.1']
    #allocation4 [shape = 's32[2]{0}', space=sflag, size = 0x8, scoped, tag = 'scoped memory for tpu_custom_call.1']
    #allocation5 [shape = 'u8[262144]{0}', space=vmem, size = 0x40000, scoped, tag = 'input window, operand 1, single buffered']
    #allocation6 [shape = 's32[1]{0}', space=sflag, size = 0x4, scoped, tag = 'scoped memory for tpu_custom_call.1']
    #allocation7 [shape = 'u8[2048]{0}', space=vmem, size = 0x800, scoped, tag = 'input window, operand 2, single buffered']
    #allocation8 [shape = 'u8[131072]{0}', space=vmem, size = 0x20000, scoped, tag = 'output window, operand 0']
    %8 = vsyncpa [#allocation3], 0
    %s9 = scalar_lea.sflag [#allocation3], 1
    %10 = vsyncpa %s9, 0
    %11 = vsyncpa [#allocation6], 0
    %12 = vsyncpa [#allocation4], 0
    %s13 = scalar_lea.sflag [#allocation4], 1
    %14 = vsyncpa %s13, 0
    loop: start=0, step=1, limit=4
    $region2: #{tpu_custom_call.1} parent=1 // loop_pre_header
      _
    $region3: #{tpu_custom_call.1} parent=1 // loop_header
      %s16 = sphi 0, %s20
      %p17 = scmp.ge.s32.totalorder %s16, 4
      %s26 = sphi 0, %s28
      %s29 = sphi 0, %s26
      %s30 = sphi 0, %s29
      %s46 = sphi 0, %s30
      %s50 = sphi 0, %s50
      %s52 = sphi 0, %s50
      %s53 = sphi 0, %s52
      %s67 = sphi 0, %s53
      %s71 = sphi 0, %s71
      %s73 = sphi 0, %s71
      %s74 = sphi 0, %s73
      %s88 = sphi 0, %s74
      %s94 = sphi 0, %s96
      %s97 = sphi 0, %s94
      %s98 = sphi 0, %s97
      %s114 = sphi 0, %s98
    $region4: #{tpu_custom_call.1} parent=1 // loop_header_branch
      %19 = sbr.rel (%p17) target = $region8
    $region5: #{tpu_custom_call.1} parent=1 // loop_body
      %s21 = ssub.s32 %s16, 1
      %s22 = ssub.s32 %s16, 2
      %s23 = sadd.s32 %s16, 1
      %s24 = ssub.s32 %s16, %s23
      %p25 = scmp.eq.s32.totalorder %s24, 0
      %s27 = sadd.s32 %s26, 1
      %s28 = scalar_select %p25, %s26, %s27
      %p31 = pneg %p25
      %p32 = scmp.eq.s32.totalorder %s16, 1
      %p33 = por %p31, %p32
      %p34 = scmp.ne.s32.totalorder %s26, %s29
      %p35 = scmp.eq.s32.totalorder %s16, 0
      %p36 = por %p34, %p35
      %p37 = scmp.ne.s32.totalorder %s26, %s29
      %p38 = scmp.eq.s32.totalorder %s21, 1
      %p39 = por %p37, %p38
      %p40 = scmp.ne.s32.totalorder %s29, %s30
      %p41 = scmp.eq.s32.totalorder %s21, 0
      %p42 = por %p40, %p41
      %p43 = scmp.ne.s32.totalorder %s29, %s30
      %p44 = scmp.eq.s32.totalorder %s22, 1
      %p45 = por %p43, %p44
      %p47 = scmp.ne.s32.totalorder %s30, %s46
      %p48 = scmp.eq.s32.totalorder %s22, 0
      %p49 = por %p47, %p48
      %s51 = sadd.s32 %s50, 1
      %p54 = scmp.eq.s32.totalorder %s16, 1
      %p55 = scmp.ne.s32.totalorder %s50, %s52
      %p56 = scmp.eq.s32.totalorder %s16, 0
      %p57 = por %p55, %p56
      %p58 = scmp.ne.s32.totalorder %s50, %s52
      %p59 = scmp.eq.s32.totalorder %s21, 1
      %p60 = por %p58, %p59
      %p61 = scmp.ne.s32.totalorder %s52, %s53
      %p62 = scmp.eq.s32.totalorder %s21, 0
      %p63 = por %p61, %p62
      %p64 = scmp.ne.s32.totalorder %s52, %s53
      %p65 = scmp.eq.s32.totalorder %s22, 1
      %p66 = por %p64, %p65
      %p68 = scmp.ne.s32.totalorder %s53, %s67
      %p69 = scmp.eq.s32.totalorder %s22, 0
      %p70 = por %p68, %p69
      %s72 = sadd.s32 %s71, 1
      %p75 = scmp.eq.s32.totalorder %s16, 1
      %p76 = scmp.ne.s32.totalorder %s71, %s73
      %p77 = scmp.eq.s32.totalorder %s16, 0
      %p78 = por %p76, %p77
      %p79 = scmp.ne.s32.totalorder %s71, %s73
      %p80 = scmp.eq.s32.totalorder %s21, 1
      %p81 = por %p79, %p80
      %p82 = scmp.ne.s32.totalorder %s73, %s74
      %p83 = scmp.eq.s32.totalorder %s21, 0
      %p84 = por %p82, %p83
      %p85 = scmp.ne.s32.totalorder %s73, %s74
      %p86 = scmp.eq.s32.totalorder %s22, 1
      %p87 = por %p85, %p86
      %p89 = scmp.ne.s32.totalorder %s74, %s88
      %p90 = scmp.eq.s32.totalorder %s22, 0
      %p91 = por %p89, %p90
      %s92 = ssub.s32 %s16, %s23
      %p93 = scmp.eq.s32.totalorder %s92, 0
      %s95 = sadd.s32 %s94, 1
      %s96 = scalar_select %p93, %s94, %s95
      %p99 = pneg %p93
      %p100 = scmp.eq.s32.totalorder %s16, 1
      %p101 = por %p99, %p100
      %p102 = scmp.ne.s32.totalorder %s94, %s97
      %p103 = scmp.eq.s32.totalorder %s16, 0
      %p104 = por %p102, %p103
      %p105 = scmp.ne.s32.totalorder %s94, %s97
      %p106 = scmp.eq.s32.totalorder %s21, 1
      %p107 = por %p105, %p106
      %p108 = scmp.ne.s32.totalorder %s97, %s98
      %p109 = scmp.eq.s32.totalorder %s21, 0
      %p110 = por %p108, %p109
      %p111 = scmp.ne.s32.totalorder %s97, %s98
      %p112 = scmp.eq.s32.totalorder %s22, 1
      %p113 = por %p111, %p112
      %p115 = scmp.ne.s32.totalorder %s98, %s114
      %p116 = scmp.eq.s32.totalorder %s22, 0
      %p117 = por %p115, %p116
      %p118 = scmp.le.s32.totalorder 1, %s16
      %p119 = scmp.lt.s32.totalorder %s16, 3
      %p120 = pnand %p118, %p119
      %p121 = pneg %p120
      // Predicated region
      $region9: #{tpu_custom_call.1} parent=5 // pred_check
        _
      $region10: #{tpu_custom_call.1} parent=5 // pred_check_branch
        %123 = sbr.rel (%p120) target = $region12
      $region11: #{tpu_custom_call.1} parent=5 // pred_region
        %s124 = ssub.s32 %s16, 1
        // Predicated region
        $region13: #{tpu_custom_call.1} parent=11 // pred_check
          %p125 = pneg %p63
        $region14: #{tpu_custom_call.1} parent=11 // pred_check_branch
          %127 = sbr.rel (%p125) target = $region16
        $region15: #{tpu_custom_call.1} parent=11 // pred_region
          %s129 = ssub.s32 8192, 8192
          %130 = vsyncadd [#allocation6], %s129
          %s131 = sshll.u32 [#allocation5], 4
          %s132 = int_to_ptr.vmem [resolvable:$true] %s131
          %137 = dma.hbm_to_vmem [thread:$0]  %s1, 8192, %s132, [#allocation6], 128, 128, 8
        $region16: #{tpu_custom_call.1} parent=11 // pred_fallthru
          _
        // Predicated region
        $region17: #{tpu_custom_call.1} parent=11 // pred_check
          %p138 = pneg %p84
        $region18: #{tpu_custom_call.1} parent=11 // pred_check_branch
          %140 = sbr.rel (%p138) target = $region20
        $region19: #{tpu_custom_call.1} parent=11 // pred_region
          %s142 = ssub.s32 64, 64
          %143 = vsyncadd [#allocation6], %s142
          %s145 = sshll.u32 [#allocation7], 4
          %s146 = int_to_ptr.vmem [resolvable:$true] %s145
          %148 = dma.hbm_to_vmem [thread:$0]  %s2, 64, %s146, [#allocation6]
        $region20: #{tpu_custom_call.1} parent=11 // pred_fallthru
          _
      $region12: #{tpu_custom_call.1} parent=5 // pred_fallthru
        _
      %p149 = scmp.lt.s32.totalorder %s16, 2
      // Predicated region
      $region21: #{tpu_custom_call.1} parent=5 // pred_check
        %p150 = pneg %p149
      $region22: #{tpu_custom_call.1} parent=5 // pred_check_branch
        %152 = sbr.rel (%p150) target = $region24
      $region23: #{tpu_custom_call.1} parent=5 // pred_region
        // Predicated region
        $region25: #{tpu_custom_call.1} parent=23 // pred_check
          %p153 = pneg %p36
        $region26: #{tpu_custom_call.1} parent=23 // pred_check_branch
          %155 = sbr.rel (%p153) target = $region28
        $region27: #{tpu_custom_call.1} parent=23 // pred_region
          %s156 = sand.u32 %s26, 1
          %s157 = scalar_lea.sflag [#allocation3], %s156
          %s158 = sand.u32 %s26, 1
          %s159 = smul.addr %s158, 128
          %s160 = scalar_lea.vmem [#allocation2], %s159
          %s161 = smul.u32 16, %s16
          %s163 = ssub.s32 2048, 2048
          %164 = vsyncadd %s157, %s163
          %s165 = smul.addr %s161, 128
          %s166 = scalar_lea.hbm %s0, %s165
          %s167 = sshll.u32 %s160, 4
          %s168 = int_to_ptr.vmem [resolvable:$true] %s167
          %173 = dma.hbm_to_vmem [thread:$0]  %s166, 2048, %s168, %s157, 128, 128, 8
        $region28: #{tpu_custom_call.1} parent=23 // pred_fallthru
          _
      $region24: #{tpu_custom_call.1} parent=5 // pred_fallthru
        _
      %p174 = scmp.le.s32.totalorder 1, %s16
      %p175 = scmp.lt.s32.totalorder %s16, 3
      %p176 = pnand %p174, %p175
      %p177 = pneg %p176
      // Predicated region
      $region29: #{tpu_custom_call.1} parent=5 // pred_check
        _
      $region30: #{tpu_custom_call.1} parent=5 // pred_check_branch
        %179 = sbr.rel (%p176) target = $region32
      $region31: #{tpu_custom_call.1} parent=5 // pred_region
        %s180 = ssub.s32 %s16, 1
        %s181 = sand.u32 %s29, 1
        %s182 = scalar_lea.sflag [#allocation3], %s181
        %s183 = sand.u32 %s29, 1
        %s184 = smul.addr %s183, 128
        %s185 = scalar_lea.vmem [#allocation2], %s184
        // Predicated region
        $region33: #{tpu_custom_call.1} parent=31 // pred_check
          %p186 = pneg %p42
        $region34: #{tpu_custom_call.1} parent=31 // pred_check_branch
          %188 = sbr.rel (%p186) target = $region36
        $region35: #{tpu_custom_call.1} parent=31 // pred_region
          %189 = dma.done %s182, 2048
        $region36: #{tpu_custom_call.1} parent=31 // pred_fallthru
          _
        // Predicated region
        $region37: #{tpu_custom_call.1} parent=31 // pred_check
          %p190 = pneg %p63
        $region38: #{tpu_custom_call.1} parent=31 // pred_check_branch
          %192 = sbr.rel (%p190) target = $region40
        $region39: #{tpu_custom_call.1} parent=31 // pred_region
          %193 = dma.done [#allocation6], 8192
        $region40: #{tpu_custom_call.1} parent=31 // pred_fallthru
          _
        // Predicated region
        $region41: #{tpu_custom_call.1} parent=31 // pred_check
          %p194 = pneg %p84
        $region42: #{tpu_custom_call.1} parent=31 // pred_check_branch
          %196 = sbr.rel (%p194) target = $region44
        $region43: #{tpu_custom_call.1} parent=31 // pred_region
          %197 = dma.done [#allocation6], 64
        $region44: #{tpu_custom_call.1} parent=31 // pred_fallthru
          _
        %s198 = sand.u32 %s29, 1
        %s199 = scalar_lea.sflag [#allocation3], %s198
        %s200 = sand.u32 %s29, 1
        %s201 = smul.addr %s200, 128
        %s202 = scalar_lea.vmem [#allocation2], %s201
        %p203 = pneg %p42
        %p204 = pneg %p39
        %p205 = pneg %p63
        %p206 = pneg %p60
        %p207 = pneg %p84
        %p208 = pneg %p81
        %p209 = pneg %p110
        %p210 = pneg %p107
        %s211 = sand.u32 %s97, 1
        %s212 = scalar_lea.sflag [#allocation4], %s211
        %s213 = sand.u32 %s97, 1
        %s214 = smul.addr %s213, 128
        %s215 = scalar_lea.vmem [#allocation8], %s214
        %s216 = smul.u32 16, %s21
        %s217 = smul.u32 16, %s21
        %v218 = vld [vmem:[%s185] sm:$0xff]
        %v219 = vld [vmem:[%s185 + $0x8] sm:$0xff]
        %v220 = vld [vmem:[%s185 + $0x10] sm:$0xff]
        %v221 = vld [vmem:[%s185 + $0x18] sm:$0xff]
        %v222 = vld [vmem:[%s185 + $0x20] sm:$0xff]
        %v223 = vld [vmem:[%s185 + $0x28] sm:$0xff]
        %v224 = vld [vmem:[%s185 + $0x30] sm:$0xff]
        %v225 = vld [vmem:[%s185 + $0x38] sm:$0xff]
        %v226 = vld [vmem:[%s185 + $0x40] sm:$0xff]
        %v227 = vld [vmem:[%s185 + $0x48] sm:$0xff]
        %v228 = vld [vmem:[%s185 + $0x50] sm:$0xff]
        %v229 = vld [vmem:[%s185 + $0x58] sm:$0xff]
        %v230 = vld [vmem:[%s185 + $0x60] sm:$0xff]
        %v231 = vld [vmem:[%s185 + $0x68] sm:$0xff]
        %v232 = vld [vmem:[%s185 + $0x70] sm:$0xff]
        %v233 = vld [vmem:[%s185 + $0x78] sm:$0xff]
        %v234 = vld [vmem:[#allocation5] sm:$0xff]
        %v235 = vld [vmem:[#allocation5 + $0x8] sm:$0xff]
        %v236 = vld [vmem:[#allocation5 + $0x10] sm:$0xff]
        %v237 = vld [vmem:[#allocation5 + $0x18] sm:$0xff]
        %v238 = vld [vmem:[#allocation5 + $0x20] sm:$0xff]
        %v239 = vld [vmem:[#allocation5 + $0x28] sm:$0xff]
        %v240 = vld [vmem:[#allocation5 + $0x30] sm:$0xff]
        %v241 = vld [vmem:[#allocation5 + $0x38] sm:$0xff]
        %v242 = vld [vmem:[#allocation5 + $0x40] sm:$0xff]
        %v243 = vld [vmem:[#allocation5 + $0x48] sm:$0xff]
        %v244 = vld [vmem:[#allocation5 + $0x50] sm:$0xff]
        %v245 = vld [vmem:[#allocation5 + $0x58] sm:$0xff]
        %v246 = vld [vmem:[#allocation5 + $0x60] sm:$0xff]
        %v247 = vld [vmem:[#allocation5 + $0x68] sm:$0xff]
        %v248 = vld [vmem:[#allocation5 + $0x70] sm:$0xff]
        %v249 = vld [vmem:[#allocation5 + $0x78] sm:$0xff]
        %v250 = vld [vmem:[#allocation7] sm:$0x1]
        %v251 = vlaneseq
        %v252 = vshrl.u32 %v251, 7
        %v253 = vsub.s32 0, %v252
        %v254 = vrot.slane %v250, %v253
        %255 = vmatprep.subr.mxu0 0.0
        %256 = vmatpush1.msra.mxu0 %v249
        %257 = vmatprep.subr.mxu0 0.0
        %258 = vmatpush1.msra.mxu0 %v248
        %259 = vmatprep.subr.mxu0 0.0
        %260 = vmatpush1.msra.mxu0 %v247
        %261 = vmatprep.subr.mxu0 0.0
        %262 = vmatpush1.msra.mxu0 %v246
        %263 = vmatprep.subr.mxu0 0.0
        %264 = vmatpush1.msra.mxu0 %v245
        %265 = vmatprep.subr.mxu0 0.0
        %266 = vmatpush1.msra.mxu0 %v244
        %267 = vmatprep.subr.mxu0 0.0
        %268 = vmatpush1.msra.mxu0 %v243
        %269 = vmatprep.subr.mxu0 0.0
        %270 = vmatpush1.msra.mxu0 %v242
        %271 = vmatprep.subr.mxu0 0.0
        %272 = vmatpush1.msra.mxu0 %v241
        %273 = vmatprep.subr.mxu0 0.0
        %274 = vmatpush1.msra.mxu0 %v240
        %275 = vmatprep.subr.mxu0 0.0
        %276 = vmatpush1.msra.mxu0 %v239
        %277 = vmatprep.subr.mxu0 0.0
        %278 = vmatpush1.msra.mxu0 %v238
        %279 = vmatprep.subr.mxu0 0.0
        %280 = vmatpush1.msra.mxu0 %v237
        %281 = vmatprep.subr.mxu0 0.0
        %282 = vmatpush1.msra.mxu0 %v236
        %283 = vmatprep.subr.mxu0 0.0
        %284 = vmatpush1.msra.mxu0 %v235
        %285 = vmatprep.subr.mxu0 0.0
        %286 = vmatpush1.msra.mxu0 %v234
        %287 = vmatprep.subr.mxu0 0.0
        %288 = vmatpush2.msra.mxu0 0.0
        %289 = vmatprep.subr.mxu0 0.0
        %290 = vmatpush2.msra.mxu0 0.0
        %291 = vmatprep.subr.mxu0 0.0
        %292 = vmatpush2.msra.mxu0 0.0
        %293 = vmatprep.subr.mxu0 0.0
        %294 = vmatpush2.msra.mxu0 0.0
        %295 = vmatprep.subr.mxu0 0.0
        %296 = vmatpush2.msra.mxu0 0.0
        %297 = vmatprep.subr.mxu0 0.0
        %298 = vmatpush2.msra.mxu0 0.0
        %299 = vmatprep.subr.mxu0 0.0
        %300 = vmatpush2.msra.mxu0 0.0
        %301 = vmatprep.subr.mxu0 0.0
        %302 = vmatpush2.msra.mxu0 0.0
        %303 = vmatprep.subr.mxu0 0.0
        %304 = vmatpush2.msra.mxu0 0.0
        %305 = vmatprep.subr.mxu0 0.0
        %306 = vmatpush2.msra.mxu0 0.0
        %307 = vmatprep.subr.mxu0 0.0
        %308 = vmatpush2.msra.mxu0 0.0
        %309 = vmatprep.subr.mxu0 0.0
        %310 = vmatpush2.msra.mxu0 0.0
        %311 = vmatprep.subr.mxu0 0.0
        %312 = vmatpush2.msra.mxu0 0.0
        %313 = vmatprep.subr.mxu0 0.0
        %314 = vmatpush2.msra.mxu0 0.0
        %315 = vmatprep.subr.mxu0 0.0
        %316 = vmatpush2.msra.mxu0 0.0
        %317 = vmatprep.subr.mxu0 0.0
        %318 = vmatpush2.msra.mxu0 0.0
        %319 = vmatprep.mubr.f32.mxu0 0.0
        %320 = vmatmul.mubr.f32.gmra.mxu0 %v218
        %v321 = vpop.f32.mrf.mxu0
        %v322 = vadd.f32 %v254, %v321
        %v323 = vpop.f32.mrf.mxu0
        %324 = vmatprep.mubr.f32.mxu0 0.0
        %325 = vmatmul.mubr.f32.gmra.mxu0 %v219
        %v326 = vpop.f32.mrf.mxu0
        %v327 = vadd.f32 %v254, %v326
        %v328 = vpop.f32.mrf.mxu0
        %329 = vmatprep.mubr.f32.mxu0 0.0
        %330 = vmatmul.mubr.f32.gmra.mxu0 %v220
        %v331 = vpop.f32.mrf.mxu0
        %v332 = vadd.f32 %v254, %v331
        %v333 = vpop.f32.mrf.mxu0
        %334 = vmatprep.mubr.f32.mxu0 0.0
        %335 = vmatmul.mubr.f32.gmra.mxu0 %v221
        %v336 = vpop.f32.mrf.mxu0
        %v337 = vadd.f32 %v254, %v336
        %v338 = vpop.f32.mrf.mxu0
        %339 = vmatprep.mubr.f32.mxu0 0.0
        %340 = vmatmul.mubr.f32.gmra.mxu0 %v222
        %v341 = vpop.f32.mrf.mxu0
        %v342 = vadd.f32 %v254, %v341
        %v343 = vpop.f32.mrf.mxu0
        %344 = vmatprep.mubr.f32.mxu0 0.0
        %345 = vmatmul.mubr.f32.gmra.mxu0 %v223
        %v346 = vpop.f32.mrf.mxu0
        %v347 = vadd.f32 %v254, %v346
        %v348 = vpop.f32.mrf.mxu0
        %349 = vmatprep.mubr.f32.mxu0 0.0
        %350 = vmatmul.mubr.f32.gmra.mxu0 %v224
        %v351 = vpop.f32.mrf.mxu0
        %v352 = vadd.f32 %v254, %v351
        %v353 = vpop.f32.mrf.mxu0
        %354 = vmatprep.mubr.f32.mxu0 0.0
        %355 = vmatmul.mubr.f32.gmra.mxu0 %v225
        %v356 = vpop.f32.mrf.mxu0
        %v357 = vadd.f32 %v254, %v356
        %v358 = vpop.f32.mrf.mxu0
        %359 = vmatprep.mubr.f32.mxu0 0.0
        %360 = vmatmul.mubr.f32.gmra.mxu0 %v226
        %v361 = vpop.f32.mrf.mxu0
        %v362 = vadd.f32 %v254, %v361
        %v363 = vpop.f32.mrf.mxu0
        %364 = vmatprep.mubr.f32.mxu0 0.0
        %365 = vmatmul.mubr.f32.gmra.mxu0 %v227
        %v366 = vpop.f32.mrf.mxu0
        %v367 = vadd.f32 %v254, %v366
        %v368 = vpop.f32.mrf.mxu0
        %369 = vmatprep.mubr.f32.mxu0 0.0
        %370 = vmatmul.mubr.f32.gmra.mxu0 %v228
        %v371 = vpop.f32.mrf.mxu0
        %v372 = vadd.f32 %v254, %v371
        %v373 = vpop.f32.mrf.mxu0
        %374 = vmatprep.mubr.f32.mxu0 0.0
        %375 = vmatmul.mubr.f32.gmra.mxu0 %v229
        %v376 = vpop.f32.mrf.mxu0
        %v377 = vadd.f32 %v254, %v376
        %v378 = vpop.f32.mrf.mxu0
        %379 = vmatprep.mubr.f32.mxu0 0.0
        %380 = vmatmul.mubr.f32.gmra.mxu0 %v230
        %v381 = vpop.f32.mrf.mxu0
        %v382 = vadd.f32 %v254, %v381
        %v383 = vpop.f32.mrf.mxu0
        %384 = vmatprep.mubr.f32.mxu0 0.0
        %385 = vmatmul.mubr.f32.gmra.mxu0 %v231
        %v386 = vpop.f32.mrf.mxu0
        %v387 = vadd.f32 %v254, %v386
        %v388 = vpop.f32.mrf.mxu0
        %389 = vmatprep.mubr.f32.mxu0 0.0
        %390 = vmatmul.mubr.f32.gmra.mxu0 %v232
        %v391 = vpop.f32.mrf.mxu0
        %v392 = vadd.f32 %v254, %v391
        %v393 = vpop.f32.mrf.mxu0
        %394 = vmatprep.mubr.f32.mxu0 0.0
        %395 = vmatmul.mubr.f32.gmra.mxu0 %v233
        %v396 = vpop.f32.mrf.mxu0
        %v397 = vadd.f32 %v254, %v396
        %v398 = vpop.f32.mrf.mxu0
        %399 = vdwg.mxu0
        %v400 = vmax.f32 %v322, 0.0
        %v401 = vmax.f32 %v327, 0.0
        %v402 = vmax.f32 %v332, 0.0
        %v403 = vmax.f32 %v337, 0.0
        %v404 = vmax.f32 %v342, 0.0
        %v405 = vmax.f32 %v347, 0.0
        %v406 = vmax.f32 %v352, 0.0
        %v407 = vmax.f32 %v357, 0.0
        %v408 = vmax.f32 %v362, 0.0
        %v409 = vmax.f32 %v367, 0.0
        %v410 = vmax.f32 %v372, 0.0
        %v411 = vmax.f32 %v377, 0.0
        %v412 = vmax.f32 %v382, 0.0
        %v413 = vmax.f32 %v387, 0.0
        %v414 = vmax.f32 %v392, 0.0
        %v415 = vmax.f32 %v397, 0.0
        %s416 = scalar_lea.vmem [#allocation5], 128
        %v417 = vld [vmem:[%s416] sm:$0xff]
        %v418 = vld [vmem:[%s416 + $0x8] sm:$0xff]
        %v419 = vld [vmem:[%s416 + $0x10] sm:$0xff]
        %v420 = vld [vmem:[%s416 + $0x18] sm:$0xff]
        %v421 = vld [vmem:[%s416 + $0x20] sm:$0xff]
        %v422 = vld [vmem:[%s416 + $0x28] sm:$0xff]
        %v423 = vld [vmem:[%s416 + $0x30] sm:$0xff]
        %v424 = vld [vmem:[%s416 + $0x38] sm:$0xff]
        %v425 = vld [vmem:[%s416 + $0x40] sm:$0xff]
        %v426 = vld [vmem:[%s416 + $0x48] sm:$0xff]
        %v427 = vld [vmem:[%s416 + $0x50] sm:$0xff]
        %v428 = vld [vmem:[%s416 + $0x58] sm:$0xff]
        %v429 = vld [vmem:[%s416 + $0x60] sm:$0xff]
        %v430 = vld [vmem:[%s416 + $0x68] sm:$0xff]
        %v431 = vld [vmem:[%s416 + $0x70] sm:$0xff]
        %v432 = vld [vmem:[%s416 + $0x78] sm:$0xff]
        %v433 = vld [vmem:[#allocation7 + $0x1] sm:$0x1]
        %v434 = vlaneseq
        %v435 = vshrl.u32 %v434, 7
        %v436 = vsub.s32 0, %v435
        %v437 = vrot.slane %v433, %v436
        %438 = vmatprep.subr.mxu0 0.0
        %439 = vmatpush1.msra.mxu0 %v432
        %440 = vmatprep.subr.mxu0 0.0
        %441 = vmatpush1.msra.mxu0 %v431
        %442 = vmatprep.subr.mxu0 0.0
        %443 = vmatpush1.msra.mxu0 %v430
        %444 = vmatprep.subr.mxu0 0.0
        %445 = vmatpush1.msra.mxu0 %v429
        %446 = vmatprep.subr.mxu0 0.0
        %447 = vmatpush1.msra.mxu0 %v428
        %448 = vmatprep.subr.mxu0 0.0
        %449 = vmatpush1.msra.mxu0 %v427
        %450 = vmatprep.subr.mxu0 0.0
        %451 = vmatpush1.msra.mxu0 %v426
        %452 = vmatprep.subr.mxu0 0.0
        %453 = vmatpush1.msra.mxu0 %v425
        %454 = vmatprep.subr.mxu0 0.0
        %455 = vmatpush1.msra.mxu0 %v424
        %456 = vmatprep.subr.mxu0 0.0
        %457 = vmatpush1.msra.mxu0 %v423
        %458 = vmatprep.subr.mxu0 0.0
        %459 = vmatpush1.msra.mxu0 %v422
        %460 = vmatprep.subr.mxu0 0.0
        %461 = vmatpush1.msra.mxu0 %v421
        %462 = vmatprep.subr.mxu0 0.0
        %463 = vmatpush1.msra.mxu0 %v420
        %464 = vmatprep.subr.mxu0 0.0
        %465 = vmatpush1.msra.mxu0 %v419
        %466 = vmatprep.subr.mxu0 0.0
        %467 = vmatpush1.msra.mxu0 %v418
        %468 = vmatprep.subr.mxu0 0.0
        %469 = vmatpush1.msra.mxu0 %v417
        %470 = vmatprep.subr.mxu0 0.0
        %471 = vmatpush2.msra.mxu0 0.0
        %472 = vmatprep.subr.mxu0 0.0
        %473 = vmatpush2.msra.mxu0 0.0
        %474 = vmatprep.subr.mxu0 0.0
        %475 = vmatpush2.msra.mxu0 0.0
        %476 = vmatprep.subr.mxu0 0.0
        %477 = vmatpush2.msra.mxu0 0.0
        %478 = vmatprep.subr.mxu0 0.0
        %479 = vmatpush2.msra.mxu0 0.0
        %480 = vmatprep.subr.mxu0 0.0
        %481 = vmatpush2.msra.mxu0 0.0
        %482 = vmatprep.subr.mxu0 0.0
        %483 = vmatpush2.msra.mxu0 0.0
        %484 = vmatprep.subr.mxu0 0.0
        %485 = vmatpush2.msra.mxu0 0.0
        %486 = vmatprep.subr.mxu0 0.0
        %487 = vmatpush2.msra.mxu0 0.0
        %488 = vmatprep.subr.mxu0 0.0
        %489 = vmatpush2.msra.mxu0 0.0
        %490 = vmatprep.subr.mxu0 0.0
        %491 = vmatpush2.msra.mxu0 0.0
        %492 = vmatprep.subr.mxu0 0.0
        %493 = vmatpush2.msra.mxu0 0.0
        %494 = vmatprep.subr.mxu0 0.0
        %495 = vmatpush2.msra.mxu0 0.0
        %496 = vmatprep.subr.mxu0 0.0
        %497 = vmatpush2.msra.mxu0 0.0
        %498 = vmatprep.subr.mxu0 0.0
        %499 = vmatpush2.msra.mxu0 0.0
        %500 = vmatprep.subr.mxu0 0.0
        %501 = vmatpush2.msra.mxu0 0.0
        %502 = vmatprep.mubr.f32.mxu0 0.0
        %503 = vmatmul.mubr.f32.gmra.mxu0 %v400
        %v504 = vpop.f32.mrf.mxu0
        %v505 = vadd.f32 %v437, %v504
        %v506 = vpop.f32.mrf.mxu0
        %507 = vmatprep.mubr.f32.mxu0 0.0
        %508 = vmatmul.mubr.f32.gmra.mxu0 %v401
        %v509 = vpop.f32.mrf.mxu0
        %v510 = vadd.f32 %v437, %v509
        %v511 = vpop.f32.mrf.mxu0
        %512 = vmatprep.mubr.f32.mxu0 0.0
        %513 = vmatmul.mubr.f32.gmra.mxu0 %v402
        %v514 = vpop.f32.mrf.mxu0
        %v515 = vadd.f32 %v437, %v514
        %v516 = vpop.f32.mrf.mxu0
        %517 = vmatprep.mubr.f32.mxu0 0.0
        %518 = vmatmul.mubr.f32.gmra.mxu0 %v403
        %v519 = vpop.f32.mrf.mxu0
        %v520 = vadd.f32 %v437, %v519
        %v521 = vpop.f32.mrf.mxu0
        %522 = vmatprep.mubr.f32.mxu0 0.0
        %523 = vmatmul.mubr.f32.gmra.mxu0 %v404
        %v524 = vpop.f32.mrf.mxu0
        %v525 = vadd.f32 %v437, %v524
        %v526 = vpop.f32.mrf.mxu0
        %527 = vmatprep.mubr.f32.mxu0 0.0
        %528 = vmatmul.mubr.f32.gmra.mxu0 %v405
        %v529 = vpop.f32.mrf.mxu0
        %v530 = vadd.f32 %v437, %v529
        %v531 = vpop.f32.mrf.mxu0
        %532 = vmatprep.mubr.f32.mxu0 0.0
        %533 = vmatmul.mubr.f32.gmra.mxu0 %v406
        %v534 = vpop.f32.mrf.mxu0
        %v535 = vadd.f32 %v437, %v534
        %v536 = vpop.f32.mrf.mxu0
        %537 = vmatprep.mubr.f32.mxu0 0.0
        %538 = vmatmul.mubr.f32.gmra.mxu0 %v407
        %v539 = vpop.f32.mrf.mxu0
        %v540 = vadd.f32 %v437, %v539
        %v541 = vpop.f32.mrf.mxu0
        %542 = vmatprep.mubr.f32.mxu0 0.0
        %543 = vmatmul.mubr.f32.gmra.mxu0 %v408
        %v544 = vpop.f32.mrf.mxu0
        %v545 = vadd.f32 %v437, %v544
        %v546 = vpop.f32.mrf.mxu0
        %547 = vmatprep.mubr.f32.mxu0 0.0
        %548 = vmatmul.mubr.f32.gmra.mxu0 %v409
        %v549 = vpop.f32.mrf.mxu0
        %v550 = vadd.f32 %v437, %v549
        %v551 = vpop.f32.mrf.mxu0
        %552 = vmatprep.mubr.f32.mxu0 0.0
        %553 = vmatmul.mubr.f32.gmra.mxu0 %v410
        %v554 = vpop.f32.mrf.mxu0
        %v555 = vadd.f32 %v437, %v554
        %v556 = vpop.f32.mrf.mxu0
        %557 = vmatprep.mubr.f32.mxu0 0.0
        %558 = vmatmul.mubr.f32.gmra.mxu0 %v411
        %v559 = vpop.f32.mrf.mxu0
        %v560 = vadd.f32 %v437, %v559
        %v561 = vpop.f32.mrf.mxu0
        %562 = vmatprep.mubr.f32.mxu0 0.0
        %563 = vmatmul.mubr.f32.gmra.mxu0 %v412
        %v564 = vpop.f32.mrf.mxu0
        %v565 = vadd.f32 %v437, %v564
        %v566 = vpop.f32.mrf.mxu0
        %567 = vmatprep.mubr.f32.mxu0 0.0
        %568 = vmatmul.mubr.f32.gmra.mxu0 %v413
        %v569 = vpop.f32.mrf.mxu0
        %v570 = vadd.f32 %v437, %v569
        %v571 = vpop.f32.mrf.mxu0
        %572 = vmatprep.mubr.f32.mxu0 0.0
        %573 = vmatmul.mubr.f32.gmra.mxu0 %v414
        %v574 = vpop.f32.mrf.mxu0
        %v575 = vadd.f32 %v437, %v574
        %v576 = vpop.f32.mrf.mxu0
        %577 = vmatprep.mubr.f32.mxu0 0.0
        %578 = vmatmul.mubr.f32.gmra.mxu0 %v415
        %v579 = vpop.f32.mrf.mxu0
        %v580 = vadd.f32 %v437, %v579
        %v581 = vpop.f32.mrf.mxu0
        %582 = vdwg.mxu0
        %v583 = vmax.f32 %v505, 0.0
        %v584 = vmax.f32 %v510, 0.0
        %v585 = vmax.f32 %v515, 0.0
        %v586 = vmax.f32 %v520, 0.0
        %v587 = vmax.f32 %v525, 0.0
        %v588 = vmax.f32 %v530, 0.0
        %v589 = vmax.f32 %v535, 0.0
        %v590 = vmax.f32 %v540, 0.0
        %v591 = vmax.f32 %v545, 0.0
        %v592 = vmax.f32 %v550, 0.0
        %v593 = vmax.f32 %v555, 0.0
        %v594 = vmax.f32 %v560, 0.0
        %v595 = vmax.f32 %v565, 0.0
        %v596 = vmax.f32 %v570, 0.0
        %v597 = vmax.f32 %v575, 0.0
        %v598 = vmax.f32 %v580, 0.0
        %s599 = scalar_lea.vmem [#allocation5], 256
        %v600 = vld [vmem:[%s599] sm:$0xff]
        %v601 = vld [vmem:[%s599 + $0x8] sm:$0xff]
        %v602 = vld [vmem:[%s599 + $0x10] sm:$0xff]
        %v603 = vld [vmem:[%s599 + $0x18] sm:$0xff]
        %v604 = vld [vmem:[%s599 + $0x20] sm:$0xff]
        %v605 = vld [vmem:[%s599 + $0x28] sm:$0xff]
        %v606 = vld [vmem:[%s599 + $0x30] sm:$0xff]
        %v607 = vld [vmem:[%s599 + $0x38] sm:$0xff]
        %v608 = vld [vmem:[%s599 + $0x40] sm:$0xff]
        %v609 = vld [vmem:[%s599 + $0x48] sm:$0xff]
        %v610 = vld [vmem:[%s599 + $0x50] sm:$0xff]
        %v611 = vld [vmem:[%s599 + $0x58] sm:$0xff]
        %v612 = vld [vmem:[%s599 + $0x60] sm:$0xff]
        %v613 = vld [vmem:[%s599 + $0x68] sm:$0xff]
        %v614 = vld [vmem:[%s599 + $0x70] sm:$0xff]
        %v615 = vld [vmem:[%s599 + $0x78] sm:$0xff]
        %v616 = vld [vmem:[#allocation7 + $0x2] sm:$0x1]
        %v617 = vlaneseq
        %v618 = vshrl.u32 %v617, 7
        %v619 = vsub.s32 0, %v618
        %v620 = vrot.slane %v616, %v619
        %621 = vmatprep.subr.mxu0 0.0
        %622 = vmatpush1.msra.mxu0 %v615
        %623 = vmatprep.subr.mxu0 0.0
        %624 = vmatpush1.msra.mxu0 %v614
        %625 = vmatprep.subr.mxu0 0.0
        %626 = vmatpush1.msra.mxu0 %v613
        %627 = vmatprep.subr.mxu0 0.0
        %628 = vmatpush1.msra.mxu0 %v612
        %629 = vmatprep.subr.mxu0 0.0
        %630 = vmatpush1.msra.mxu0 %v611
        %631 = vmatprep.subr.mxu0 0.0
        %632 = vmatpush1.msra.mxu0 %v610
        %633 = vmatprep.subr.mxu0 0.0
        %634 = vmatpush1.msra.mxu0 %v609
        %635 = vmatprep.subr.mxu0 0.0
        %636 = vmatpush1.msra.mxu0 %v608
        %637 = vmatprep.subr.mxu0 0.0
        %638 = vmatpush1.msra.mxu0 %v607
        %639 = vmatprep.subr.mxu0 0.0
        %640 = vmatpush1.msra.mxu0 %v606
        %641 = vmatprep.subr.mxu0 0.0
        %642 = vmatpush1.msra.mxu0 %v605
        %643 = vmatprep.subr.mxu0 0.0
        %644 = vmatpush1.msra.mxu0 %v604
        %645 = vmatprep.subr.mxu0 0.0
        %646 = vmatpush1.msra.mxu0 %v603
        %647 = vmatprep.subr.mxu0 0.0
        %648 = vmatpush1.msra.mxu0 %v602
        %649 = vmatprep.subr.mxu0 0.0
        %650 = vmatpush1.msra.mxu0 %v601
        %651 = vmatprep.subr.mxu0 0.0
        %652 = vmatpush1.msra.mxu0 %v600
        %653 = vmatprep.subr.mxu0 0.0
        %654 = vmatpush2.msra.mxu0 0.0
        %655 = vmatprep.subr.mxu0 0.0
        %656 = vmatpush2.msra.mxu0 0.0
        %657 = vmatprep.subr.mxu0 0.0
        %658 = vmatpush2.msra.mxu0 0.0
        %659 = vmatprep.subr.mxu0 0.0
        %660 = vmatpush2.msra.mxu0 0.0
        %661 = vmatprep.subr.mxu0 0.0
        %662 = vmatpush2.msra.mxu0 0.0
        %663 = vmatprep.subr.mxu0 0.0
        %664 = vmatpush2.msra.mxu0 0.0
        %665 = vmatprep.subr.mxu0 0.0
        %666 = vmatpush2.msra.mxu0 0.0
        %667 = vmatprep.subr.mxu0 0.0
        %668 = vmatpush2.msra.mxu0 0.0
        %669 = vmatprep.subr.mxu0 0.0
        %670 = vmatpush2.msra.mxu0 0.0
        %671 = vmatprep.subr.mxu0 0.0
        %672 = vmatpush2.msra.mxu0 0.0
        %673 = vmatprep.subr.mxu0 0.0
        %674 = vmatpush2.msra.mxu0 0.0
        %675 = vmatprep.subr.mxu0 0.0
        %676 = vmatpush2.msra.mxu0 0.0
        %677 = vmatprep.subr.mxu0 0.0
        %678 = vmatpush2.msra.mxu0 0.0
        %679 = vmatprep.subr.mxu0 0.0
        %680 = vmatpush2.msra.mxu0 0.0
        %681 = vmatprep.subr.mxu0 0.0
        %682 = vmatpush2.msra.mxu0 0.0
        %683 = vmatprep.subr.mxu0 0.0
        %684 = vmatpush2.msra.mxu0 0.0
        %685 = vmatprep.mubr.f32.mxu0 0.0
        %686 = vmatmul.mubr.f32.gmra.mxu0 %v583
        %v687 = vpop.f32.mrf.mxu0
        %v688 = vadd.f32 %v620, %v687
        %v689 = vpop.f32.mrf.mxu0
        %690 = vmatprep.mubr.f32.mxu0 0.0
        %691 = vmatmul.mubr.f32.gmra.mxu0 %v584
        %v692 = vpop.f32.mrf.mxu0
        %v693 = vadd.f32 %v620, %v692
        %v694 = vpop.f32.mrf.mxu0
        %695 = vmatprep.mubr.f32.mxu0 0.0
        %696 = vmatmul.mubr.f32.gmra.mxu0 %v585
        %v697 = vpop.f32.mrf.mxu0
        %v698 = vadd.f32 %v620, %v697
        %v699 = vpop.f32.mrf.mxu0
        %700 = vmatprep.mubr.f32.mxu0 0.0
        %701 = vmatmul.mubr.f32.gmra.mxu0 %v586
        %v702 = vpop.f32.mrf.mxu0
        %v703 = vadd.f32 %v620, %v702
        %v704 = vpop.f32.mrf.mxu0
        %705 = vmatprep.mubr.f32.mxu0 0.0
        %706 = vmatmul.mubr.f32.gmra.mxu0 %v587
        %v707 = vpop.f32.mrf.mxu0
        %v708 = vadd.f32 %v620, %v707
        %v709 = vpop.f32.mrf.mxu0
        %710 = vmatprep.mubr.f32.mxu0 0.0
        %711 = vmatmul.mubr.f32.gmra.mxu0 %v588
        %v712 = vpop.f32.mrf.mxu0
        %v713 = vadd.f32 %v620, %v712
        %v714 = vpop.f32.mrf.mxu0
        %715 = vmatprep.mubr.f32.mxu0 0.0
        %716 = vmatmul.mubr.f32.gmra.mxu0 %v589
        %v717 = vpop.f32.mrf.mxu0
        %v718 = vadd.f32 %v620, %v717
        %v719 = vpop.f32.mrf.mxu0
        %720 = vmatprep.mubr.f32.mxu0 0.0
        %721 = vmatmul.mubr.f32.gmra.mxu0 %v590
        %v722 = vpop.f32.mrf.mxu0
        %v723 = vadd.f32 %v620, %v722
        %v724 = vpop.f32.mrf.mxu0
        %725 = vmatprep.mubr.f32.mxu0 0.0
        %726 = vmatmul.mubr.f32.gmra.mxu0 %v591
        %v727 = vpop.f32.mrf.mxu0
        %v728 = vadd.f32 %v620, %v727
        %v729 = vpop.f32.mrf.mxu0
        %730 = vmatprep.mubr.f32.mxu0 0.0
        %731 = vmatmul.mubr.f32.gmra.mxu0 %v592
        %v732 = vpop.f32.mrf.mxu0
        %v733 = vadd.f32 %v620, %v732
        %v734 = vpop.f32.mrf.mxu0
        %735 = vmatprep.mubr.f32.mxu0 0.0
        %736 = vmatmul.mubr.f32.gmra.mxu0 %v593
        %v737 = vpop.f32.mrf.mxu0
        %v738 = vadd.f32 %v620, %v737
        %v739 = vpop.f32.mrf.mxu0
        %740 = vmatprep.mubr.f32.mxu0 0.0
        %741 = vmatmul.mubr.f32.gmra.mxu0 %v594
        %v742 = vpop.f32.mrf.mxu0
        %v743 = vadd.f32 %v620, %v742
        %v744 = vpop.f32.mrf.mxu0
        %745 = vmatprep.mubr.f32.mxu0 0.0
        %746 = vmatmul.mubr.f32.gmra.mxu0 %v595
        %v747 = vpop.f32.mrf.mxu0
        %v748 = vadd.f32 %v620, %v747
        %v749 = vpop.f32.mrf.mxu0
        %750 = vmatprep.mubr.f32.mxu0 0.0
        %751 = vmatmul.mubr.f32.gmra.mxu0 %v596
        %v752 = vpop.f32.mrf.mxu0
        %v753 = vadd.f32 %v620, %v752
        %v754 = vpop.f32.mrf.mxu0
        %755 = vmatprep.mubr.f32.mxu0 0.0
        %756 = vmatmul.mubr.f32.gmra.mxu0 %v597
        %v757 = vpop.f32.mrf.mxu0
        %v758 = vadd.f32 %v620, %v757
        %v759 = vpop.f32.mrf.mxu0
        %760 = vmatprep.mubr.f32.mxu0 0.0
        %761 = vmatmul.mubr.f32.gmra.mxu0 %v598
        %v762 = vpop.f32.mrf.mxu0
        %v763 = vadd.f32 %v620, %v762
        %v764 = vpop.f32.mrf.mxu0
        %765 = vdwg.mxu0
        %v766 = vmax.f32 %v688, 0.0
        %v767 = vmax.f32 %v693, 0.0
        %v768 = vmax.f32 %v698, 0.0
        %v769 = vmax.f32 %v703, 0.0
        %v770 = vmax.f32 %v708, 0.0
        %v771 = vmax.f32 %v713, 0.0
        %v772 = vmax.f32 %v718, 0.0
        %v773 = vmax.f32 %v723, 0.0
        %v774 = vmax.f32 %v728, 0.0
        %v775 = vmax.f32 %v733, 0.0
        %v776 = vmax.f32 %v738, 0.0
        %v777 = vmax.f32 %v743, 0.0
        %v778 = vmax.f32 %v748, 0.0
        %v779 = vmax.f32 %v753, 0.0
        %v780 = vmax.f32 %v758, 0.0
        %v781 = vmax.f32 %v763, 0.0
        %s782 = scalar_lea.vmem [#allocation5], 384
        %v783 = vld [vmem:[%s782] sm:$0xff]
        %v784 = vld [vmem:[%s782 + $0x8] sm:$0xff]
        %v785 = vld [vmem:[%s782 + $0x10] sm:$0xff]
        %v786 = vld [vmem:[%s782 + $0x18] sm:$0xff]
        %v787 = vld [vmem:[%s782 + $0x20] sm:$0xff]
        %v788 = vld [vmem:[%s782 + $0x28] sm:$0xff]
        %v789 = vld [vmem:[%s782 + $0x30] sm:$0xff]
        %v790 = vld [vmem:[%s782 + $0x38] sm:$0xff]
        %v791 = vld [vmem:[%s782 + $0x40] sm:$0xff]
        %v792 = vld [vmem:[%s782 + $0x48] sm:$0xff]
        %v793 = vld [vmem:[%s782 + $0x50] sm:$0xff]
        %v794 = vld [vmem:[%s782 + $0x58] sm:$0xff]
        %v795 = vld [vmem:[%s782 + $0x60] sm:$0xff]
        %v796 = vld [vmem:[%s782 + $0x68] sm:$0xff]
        %v797 = vld [vmem:[%s782 + $0x70] sm:$0xff]
        %v798 = vld [vmem:[%s782 + $0x78] sm:$0xff]
        %v799 = vld [vmem:[#allocation7 + $0x3] sm:$0x1]
        %v800 = vlaneseq
        %v801 = vshrl.u32 %v800, 7
        %v802 = vsub.s32 0, %v801
        %v803 = vrot.slane %v799, %v802
        %804 = vmatprep.subr.mxu0 0.0
        %805 = vmatpush1.msra.mxu0 %v798
        %806 = vmatprep.subr.mxu0 0.0
        %807 = vmatpush1.msra.mxu0 %v797
        %808 = vmatprep.subr.mxu0 0.0
        %809 = vmatpush1.msra.mxu0 %v796
        %810 = vmatprep.subr.mxu0 0.0
        %811 = vmatpush1.msra.mxu0 %v795
        %812 = vmatprep.subr.mxu0 0.0
        %813 = vmatpush1.msra.mxu0 %v794
        %814 = vmatprep.subr.mxu0 0.0
        %815 = vmatpush1.msra.mxu0 %v793
        %816 = vmatprep.subr.mxu0 0.0
        %817 = vmatpush1.msra.mxu0 %v792
        %818 = vmatprep.subr.mxu0 0.0
        %819 = vmatpush1.msra.mxu0 %v791
        %820 = vmatprep.subr.mxu0 0.0
        %821 = vmatpush1.msra.mxu0 %v790
        %822 = vmatprep.subr.mxu0 0.0
        %823 = vmatpush1.msra.mxu0 %v789
        %824 = vmatprep.subr.mxu0 0.0
        %825 = vmatpush1.msra.mxu0 %v788
        %826 = vmatprep.subr.mxu0 0.0
        %827 = vmatpush1.msra.mxu0 %v787
        %828 = vmatprep.subr.mxu0 0.0
        %829 = vmatpush1.msra.mxu0 %v786
        %830 = vmatprep.subr.mxu0 0.0
        %831 = vmatpush1.msra.mxu0 %v785
        %832 = vmatprep.subr.mxu0 0.0
        %833 = vmatpush1.msra.mxu0 %v784
        %834 = vmatprep.subr.mxu0 0.0
        %835 = vmatpush1.msra.mxu0 %v783
        %836 = vmatprep.subr.mxu0 0.0
        %837 = vmatpush2.msra.mxu0 0.0
        %838 = vmatprep.subr.mxu0 0.0
        %839 = vmatpush2.msra.mxu0 0.0
        %840 = vmatprep.subr.mxu0 0.0
        %841 = vmatpush2.msra.mxu0 0.0
        %842 = vmatprep.subr.mxu0 0.0
        %843 = vmatpush2.msra.mxu0 0.0
        %844 = vmatprep.subr.mxu0 0.0
        %845 = vmatpush2.msra.mxu0 0.0
        %846 = vmatprep.subr.mxu0 0.0
        %847 = vmatpush2.msra.mxu0 0.0
        %848 = vmatprep.subr.mxu0 0.0
        %849 = vmatpush2.msra.mxu0 0.0
        %850 = vmatprep.subr.mxu0 0.0
        %851 = vmatpush2.msra.mxu0 0.0
        %852 = vmatprep.subr.mxu0 0.0
        %853 = vmatpush2.msra.mxu0 0.0
        %854 = vmatprep.subr.mxu0 0.0
        %855 = vmatpush2.msra.mxu0 0.0
        %856 = vmatprep.subr.mxu0 0.0
        %857 = vmatpush2.msra.mxu0 0.0
        %858 = vmatprep.subr.mxu0 0.0
        %859 = vmatpush2.msra.mxu0 0.0
        %860 = vmatprep.subr.mxu0 0.0
        %861 = vmatpush2.msra.mxu0 0.0
        %862 = vmatprep.subr.mxu0 0.0
        %863 = vmatpush2.msra.mxu0 0.0
        %864 = vmatprep.subr.mxu0 0.0
        %865 = vmatpush2.msra.mxu0 0.0
        %866 = vmatprep.subr.mxu0 0.0
        %867 = vmatpush2.msra.mxu0 0.0
        %868 = vmatprep.mubr.f32.mxu0 0.0
        %869 = vmatmul.mubr.f32.gmra.mxu0 %v766
        %v870 = vpop.f32.mrf.mxu0
        %v871 = vadd.f32 %v803, %v870
        %v872 = vpop.f32.mrf.mxu0
        %873 = vmatprep.mubr.f32.mxu0 0.0
        %874 = vmatmul.mubr.f32.gmra.mxu0 %v767
        %v875 = vpop.f32.mrf.mxu0
        %v876 = vadd.f32 %v803, %v875
        %v877 = vpop.f32.mrf.mxu0
        %878 = vmatprep.mubr.f32.mxu0 0.0
        %879 = vmatmul.mubr.f32.gmra.mxu0 %v768
        %v880 = vpop.f32.mrf.mxu0
        %v881 = vadd.f32 %v803, %v880
        %v882 = vpop.f32.mrf.mxu0
        %883 = vmatprep.mubr.f32.mxu0 0.0
        %884 = vmatmul.mubr.f32.gmra.mxu0 %v769
        %v885 = vpop.f32.mrf.mxu0
        %v886 = vadd.f32 %v803, %v885
        %v887 = vpop.f32.mrf.mxu0
        %888 = vmatprep.mubr.f32.mxu0 0.0
        %889 = vmatmul.mubr.f32.gmra.mxu0 %v770
        %v890 = vpop.f32.mrf.mxu0
        %v891 = vadd.f32 %v803, %v890
        %v892 = vpop.f32.mrf.mxu0
        %893 = vmatprep.mubr.f32.mxu0 0.0
        %894 = vmatmul.mubr.f32.gmra.mxu0 %v771
        %v895 = vpop.f32.mrf.mxu0
        %v896 = vadd.f32 %v803, %v895
        %v897 = vpop.f32.mrf.mxu0
        %898 = vmatprep.mubr.f32.mxu0 0.0
        %899 = vmatmul.mubr.f32.gmra.mxu0 %v772
        %v900 = vpop.f32.mrf.mxu0
        %v901 = vadd.f32 %v803, %v900
        %v902 = vpop.f32.mrf.mxu0
        %903 = vmatprep.mubr.f32.mxu0 0.0
        %904 = vmatmul.mubr.f32.gmra.mxu0 %v773
        %v905 = vpop.f32.mrf.mxu0
        %v906 = vadd.f32 %v803, %v905
        %v907 = vpop.f32.mrf.mxu0
        %908 = vmatprep.mubr.f32.mxu0 0.0
        %909 = vmatmul.mubr.f32.gmra.mxu0 %v774
        %v910 = vpop.f32.mrf.mxu0
        %v911 = vadd.f32 %v803, %v910
        %v912 = vpop.f32.mrf.mxu0
        %913 = vmatprep.mubr.f32.mxu0 0.0
        %914 = vmatmul.mubr.f32.gmra.mxu0 %v775
        %v915 = vpop.f32.mrf.mxu0
        %v916 = vadd.f32 %v803, %v915
        %v917 = vpop.f32.mrf.mxu0
        %918 = vmatprep.mubr.f32.mxu0 0.0
        %919 = vmatmul.mubr.f32.gmra.mxu0 %v776
        %v920 = vpop.f32.mrf.mxu0
        %v921 = vadd.f32 %v803, %v920
        %v922 = vpop.f32.mrf.mxu0
        %923 = vmatprep.mubr.f32.mxu0 0.0
        %924 = vmatmul.mubr.f32.gmra.mxu0 %v777
        %v925 = vpop.f32.mrf.mxu0
        %v926 = vadd.f32 %v803, %v925
        %v927 = vpop.f32.mrf.mxu0
        %928 = vmatprep.mubr.f32.mxu0 0.0
        %929 = vmatmul.mubr.f32.gmra.mxu0 %v778
        %v930 = vpop.f32.mrf.mxu0
        %v931 = vadd.f32 %v803, %v930
        %v932 = vpop.f32.mrf.mxu0
        %933 = vmatprep.mubr.f32.mxu0 0.0
        %934 = vmatmul.mubr.f32.gmra.mxu0 %v779
        %v935 = vpop.f32.mrf.mxu0
        %v936 = vadd.f32 %v803, %v935
        %v937 = vpop.f32.mrf.mxu0
        %938 = vmatprep.mubr.f32.mxu0 0.0
        %939 = vmatmul.mubr.f32.gmra.mxu0 %v780
        %v940 = vpop.f32.mrf.mxu0
        %v941 = vadd.f32 %v803, %v940
        %v942 = vpop.f32.mrf.mxu0
        %943 = vmatprep.mubr.f32.mxu0 0.0
        %944 = vmatmul.mubr.f32.gmra.mxu0 %v781
        %v945 = vpop.f32.mrf.mxu0
        %v946 = vadd.f32 %v803, %v945
        %v947 = vpop.f32.mrf.mxu0
        %948 = vdwg.mxu0
        %v949 = vmax.f32 %v871, 0.0
        %v950 = vmax.f32 %v876, 0.0
        %v951 = vmax.f32 %v881, 0.0
        %v952 = vmax.f32 %v886, 0.0
        %v953 = vmax.f32 %v891, 0.0
        %v954 = vmax.f32 %v896, 0.0
        %v955 = vmax.f32 %v901, 0.0
        %v956 = vmax.f32 %v906, 0.0
        %v957 = vmax.f32 %v911, 0.0
        %v958 = vmax.f32 %v916, 0.0
        %v959 = vmax.f32 %v921, 0.0
        %v960 = vmax.f32 %v926, 0.0
        %v961 = vmax.f32 %v931, 0.0
        %v962 = vmax.f32 %v936, 0.0
        %v963 = vmax.f32 %v941, 0.0
        %v964 = vmax.f32 %v946, 0.0
        %965 = vst [vmem:[%s215] sm:$0xff] %v949
        %966 = vst [vmem:[%s215 + $0x8] sm:$0xff] %v950
        %967 = vst [vmem:[%s215 + $0x10] sm:$0xff] %v951
        %968 = vst [vmem:[%s215 + $0x18] sm:$0xff] %v952
        %969 = vst [vmem:[%s215 + $0x20] sm:$0xff] %v953
        %970 = vst [vmem:[%s215 + $0x28] sm:$0xff] %v954
        %971 = vst [vmem:[%s215 + $0x30] sm:$0xff] %v955
        %972 = vst [vmem:[%s215 + $0x38] sm:$0xff] %v956
        %973 = vst [vmem:[%s215 + $0x40] sm:$0xff] %v957
        %974 = vst [vmem:[%s215 + $0x48] sm:$0xff] %v958
        %975 = vst [vmem:[%s215 + $0x50] sm:$0xff] %v959
        %976 = vst [vmem:[%s215 + $0x58] sm:$0xff] %v960
        %977 = vst [vmem:[%s215 + $0x60] sm:$0xff] %v961
        %978 = vst [vmem:[%s215 + $0x68] sm:$0xff] %v962
        %979 = vst [vmem:[%s215 + $0x70] sm:$0xff] %v963
        %980 = vst [vmem:[%s215 + $0x78] sm:$0xff] %v964
        %s981 = sand.u32 %s97, 1
        %s982 = scalar_lea.sflag [#allocation4], %s981
        %s983 = sand.u32 %s97, 1
        %s984 = smul.addr %s983, 128
        %s985 = scalar_lea.vmem [#allocation8], %s984
        // Predicated region
        $region45: #{tpu_custom_call.1} parent=31 // pred_check
          %p986 = pneg %p107
        $region46: #{tpu_custom_call.1} parent=31 // pred_check_branch
          %988 = sbr.rel (%p986) target = $region48
        $region47: #{tpu_custom_call.1} parent=31 // pred_region
          %s989 = smul.u32 16, %s21
          %s991 = ssub.s32 2048, 2048
          %992 = vsyncadd %s982, %s991
          %s993 = smul.addr %s989, 128
          %s994 = scalar_lea.hbm %s3, %s993
          %s995 = sshll.u32 %s985, 4
          %s996 = int_to_ptr.vmem [resolvable:$true] %s995
          %1001 = dma.vmem_to_hbm [thread:$0]  %s996, 2048, %s994, %s982, 128, 128, 8
        $region48: #{tpu_custom_call.1} parent=31 // pred_fallthru
          _
      $region32: #{tpu_custom_call.1} parent=5 // pred_fallthru
        _
      %p1002 = scmp.le.s32.totalorder 2, %s16
      // Predicated region
      $region49: #{tpu_custom_call.1} parent=5 // pred_check
        %p1003 = pneg %p1002
      $region50: #{tpu_custom_call.1} parent=5 // pred_check_branch
        %1005 = sbr.rel (%p1003) target = $region52
      $region51: #{tpu_custom_call.1} parent=5 // pred_region
        %s1006 = ssub.s32 %s16, 2
        // Predicated region
        $region53: #{tpu_custom_call.1} parent=51 // pred_check
          %p1007 = pneg %p113
        $region54: #{tpu_custom_call.1} parent=51 // pred_check_branch
          %1009 = sbr.rel (%p1007) target = $region56
        $region55: #{tpu_custom_call.1} parent=51 // pred_region
          %s1010 = sand.u32 %s98, 1
          %s1011 = scalar_lea.sflag [#allocation4], %s1010
          %s1012 = sand.u32 %s98, 1
          %s1013 = smul.addr %s1012, 128
          %s1014 = scalar_lea.vmem [#allocation8], %s1013
          %1015 = dma.done %s1011, 2048
        $region56: #{tpu_custom_call.1} parent=51 // pred_fallthru
          _
      $region52: #{tpu_custom_call.1} parent=5 // pred_fallthru
        _
    $region6: #{tpu_custom_call.1} parent=1 // loop_footer
      %s20 = sadd.s32 1, %s16
    $region7: #{tpu_custom_call.1} parent=1 // loop_footer_branch
      %15 = sbr.rel target = $region3
    $region8: #{tpu_custom_call.1} parent=1 // loop_exit
      _
    %1016 = vsyncpa [#allocation3], 1
    %s1017 = scalar_lea.sflag [#allocation3], 1
    %1018 = vsyncpa %s1017, 1
    %1019 = vsyncpa [#allocation6], 1
    %1020 = vsyncpa [#allocation4], 1
    %s1021 = scalar_lea.sflag [#allocation4], 1
    %1022 = vsyncpa %s1021, 1

</llo_original>
